<compile_context>
chip_gen: v6e
topology: v6e:2x2x1
jax: 0.10.0
libtpu: 0.0.40
codegen_flags: <defaults>
</compile_context>

<pallas_src>
import functools

import numpy as np
import jax
import jax.numpy as jnp
from jax import lax
from jax.experimental import pallas as pl
from jax.experimental.pallas import tpu as pltpu

NER_PAD_ID = 0          # synthetic stand-in for EE_label2id1[NER_PAD]
NEG = -1e30             # "-inf" that stays NaN-free under 0 * NEG and NEG + NEG


def _round_up(x, m):
    return (x + m - 1) // m * m


def _batch_tile(B):
    """Batch tile for the CRF kernels: a multiple of 8 when possible (so the batch
    grid axis is tileable and can shard across TensorCores), else the whole batch."""
    return 8 if B % 8 == 0 else B


def _seq_tile(S, bytes_per_row, target_bytes=8 << 20):
    """Seq tile for the emission matmul: largest divisor of S that is a multiple of 8
    and keeps the per-step block under ~target_bytes; falls back to the full S."""
    limit = max(1, target_bytes // max(1, bytes_per_row))
    candidates = [d for d in range(8, S + 1, 8) if S % d == 0 and d <= limit]
    return max(candidates) if candidates else S


def _vmem_limit(block_bytes):
    # Explicit scoped-VMEM budget: ~2x blocks (double buffering) + headroom;
    # floor 32 MiB (above v5e's 16 MiB default), cap 64 MiB (v7x physical per-core).
    return int(min(max(2 * block_bytes + (8 << 20), 32 << 20), 64 << 20))


# --------------------------------------------------------------------------
# Kernel 1: emission head  (Linear: x @ W^T + b), seq-major + label-padded output
# --------------------------------------------------------------------------
def _emission_kernel(x_ref, w_ref, b_ref, o_ref):
    # x_ref [B, ts, H] -> o_ref [ts, B, Lp]  (seq-major output: transpose fused into
    # the output BlockSpec + per-batch column writes, no HBM transpose pass)
    w = w_ref[...]                                   # [H, Lp]
    b = b_ref[...]                                   # [1, Lp]
    for bi in range(x_ref.shape[0]):                 # static unroll over batch
        y = jnp.dot(x_ref[bi], w, preferred_element_type=jnp.float32) + b   # MXU
        o_ref[:, bi:bi + 1, :] = y[:, None, :].astype(o_ref.dtype)


def linear_emissions_seqmajor(hidden_states, weight, bias, Lp):
    """Linear emission head.  Returns emissions in seq-major padded layout [S, B, Lp].
    Dropout is identity at inference time."""
    B, S, H = hidden_states.shape
    L = weight.shape[0]
    # Pad the label (lane) dimension to Lp=128k: padded labels get zero emissions and
    # are excluded from the CRF via NEG start/end/transition entries.
    w_pad = jnp.zeros((H, Lp), jnp.float32).at[:, :L].set(weight.T.astype(jnp.float32))
    b_pad = jnp.zeros((1, Lp), jnp.float32).at[:, :L].set(bias.astype(jnp.float32))

    ts = _seq_tile(S, B * (H + Lp) * 4)
    block_bytes = B * ts * H * 4 + ts * B * Lp * 4 + H * Lp * 4 + Lp * 4
    return pl.pallas_call(
        _emission_kernel,
        out_shape=jax.ShapeDtypeStruct((S, B, Lp), jnp.float32),
        grid=(S // ts,),
        in_specs=[
            pl.BlockSpec((B, ts, H), lambda i: (0, i, 0)),
            pl.BlockSpec((H, Lp), lambda i: (0, 0)),
            pl.BlockSpec((1, Lp), lambda i: (0, 0)),
        ],
        out_specs=pl.BlockSpec((ts, B, Lp), lambda i: (i, 0, 0)),
        compiler_params=pltpu.CompilerParams(
            dimension_semantics=("parallel",),
            vmem_limit_bytes=_vmem_limit(block_bytes),
        ),
    )(hidden_states.astype(jnp.float32), w_pad, b_pad)


# --------------------------------------------------------------------------
# Kernel 2: CRF negative log-likelihood (forward algorithm + gold-path score)
#   per-tile layout: emis [S, tb, Lp], tags/mask [S, tb, 1], start/end [1, Lp],
#                    trans [Lp, Lp], transT [Lp, Lp] (previous tag on the lane axis)
# --------------------------------------------------------------------------
def _crf_loss_kernel(emis_ref, tags_ref, mask_ref, start_ref, end_ref,
                     trans_ref, transT_ref, loss_ref):
    S, Bt, Lp = emis_ref.shape
    start = start_ref[...]            # [1, Lp]
    end = end_ref[...]                # [1, Lp]
    trans = trans_ref[...]            # [Lp, Lp]  trans[i, j]
    transT = transT_ref[...]          # [Lp, Lp]  transT[j, i] == trans[i, j]
    lane = lax.broadcasted_iota(jnp.int32, (Bt, Lp), 1)

    def onehot(t):                    # [Bt, 1] int32 -> [Bt, Lp] f32
        return (lane == t).astype(jnp.float32)

    # NOTE: like torchcrf, assumes mask[:, 0] is all ones.
    emis0 = emis_ref[0]
    oh0 = onehot(tags_ref[0])
    numer = jnp.sum(oh0 * (start + emis0), axis=-1, keepdims=True)    # [Bt, 1]
    alpha = start + emis0                                             # [Bt, Lp]

    def body(t, carry):
        numer, alpha, prev_oh = carry
        emis_t = emis_ref[t]                             # [Bt, Lp]
        m = mask_ref[t] > 0                              # [Bt, 1]
        mf = m.astype(jnp.float32)
        oh_t = onehot(tags_ref[t])
        # gold path: transitions[tags[t-1], tags[t]] + emissions[t, tags[t]]
        # (one-hot row gather runs on the otherwise-idle MXU instead of VALU/XLU)
        trans_row = jnp.dot(prev_oh, trans, preferred_element_type=jnp.float32)
        step = jnp.sum(oh_t * (trans_row + emis_t), axis=-1, keepdims=True)
        numer = numer + mf * step
        # forward recurrence; previous tag is the dense 128-wide lane axis.
        inner = alpha[:, None, :] + transT[None, :, :]   # [Bt, Lp(next), Lp(prev)]
        mx = jnp.max(inner, axis=-1)                     # [Bt, Lp]
        lse = mx + jnp.log(jnp.sum(jnp.exp(inner - mx[:, :, None]), axis=-1))
        nxt = lse + emis_t
        alpha = jnp.where(m, nxt, alpha)
        prev_oh = jnp.where(m, oh_t, prev_oh)
        return numer, alpha, prev_oh

    numer, alpha, prev_oh = lax.fori_loop(1, S, body, (numer, alpha, oh0),
                                          unroll=2)
    numer = numer + jnp.sum(prev_oh * end, axis=-1, keepdims=True)   # end[last tag]
    fin = alpha + end
    mx = jnp.max(fin, axis=-1, keepdims=True)
    denom = mx + jnp.log(jnp.sum(jnp.exp(fin - mx), axis=-1, keepdims=True))
    # torchcrf reduction='sum' over this batch tile; tiles are summed outside.
    loss_ref[...] = (-jnp.sum(numer - denom)).reshape(1, 1, 1)


def crf_loss(emis_sbl, labels, mask, start_p, end_p, trans_p):
    S, B, Lp = emis_sbl.shape
    tb = _batch_tile(B)
    nb = B // tb
    tags_sb1 = jnp.transpose(labels, (1, 0))[:, :, None].astype(jnp.int32)
    mask_sb1 = jnp.transpose(mask, (1, 0))[:, :, None].astype(jnp.int32)
    block_bytes = S * tb * (Lp + 2) * 4 + 2 * Lp * 4 + 2 * Lp * Lp * 4
    partial = pl.pallas_call(
        _crf_loss_kernel,
        out_shape=jax.ShapeDtypeStruct((nb, 1, 1), jnp.float32),
        grid=(nb,),
        in_specs=[
            pl.BlockSpec((S, tb, Lp), lambda i: (0, i, 0)),
            pl.BlockSpec((S, tb, 1), lambda i: (0, i, 0)),
            pl.BlockSpec((S, tb, 1), lambda i: (0, i, 0)),
            pl.BlockSpec((1, Lp), lambda i: (0, 0)),
            pl.BlockSpec((1, Lp), lambda i: (0, 0)),
            pl.BlockSpec((Lp, Lp), lambda i: (0, 0)),
            pl.BlockSpec((Lp, Lp), lambda i: (0, 0)),
        ],
        out_specs=pl.BlockSpec((1, 1, 1), lambda i: (i, 0, 0)),
        compiler_params=pltpu.CompilerParams(
            dimension_semantics=("parallel",),   # batch tiles shard across cores
            vmem_limit_bytes=_vmem_limit(block_bytes),
        ),
    )(emis_sbl, tags_sb1, mask_sb1, start_p, end_p, trans_p,
      jnp.transpose(trans_p))
    return jnp.sum(partial)                      # reduce per-tile partial sums


# --------------------------------------------------------------------------
# Kernel 3: CRF Viterbi decode (max recurrence + in-kernel backtrack)
# --------------------------------------------------------------------------
def _viterbi_kernel(emis_ref, mask_ref, start_ref, end_ref, transT_ref,
                    pred_ref, hist_ref, *, label_pad_id):
    S, Bt, Lp = emis_ref.shape
    start = start_ref[...]
    end = end_ref[...]
    transT = transT_ref[...]                              # transT[j, i] = trans[i, j]
    lane = lax.broadcasted_iota(jnp.int32, (Bt, Lp), 1)
    idx_prev = lax.broadcasted_iota(jnp.int32, (Bt, Lp, Lp), 2)   # hoisted broadcast

    hist_ref[0] = jnp.zeros((Bt, Lp), jnp.int32)
    score0 = start + emis_ref[0]                          # [Bt, Lp]

    def fwd(t, score):
        emis_t = emis_ref[t]
        m = mask_ref[t] > 0
        # next-tag scores; previous tag on the dense lane axis.
        inner = score[:, None, :] + transT[None, :, :] + emis_t[:, :, None]
        nxt = jnp.max(inner, axis=-1)                     # [Bt, Lp]
        # first-max backpointer as a lane reduce (argmax primitive is not
        # guaranteed to lower in Mosaic; compare+min matches torch/np tie-break).
        bp = jnp.min(jnp.where(inner == nxt[:, :, None], idx_prev, Lp),
                     axis=-1).astype(jnp.int32)
        hist_ref[t] = bp
        return jnp.where(m, nxt, score)

    score = lax.fori_loop(1, S, fwd, score0, unroll=2)
    score = score + end

    seq_len = jnp.sum((mask_ref[...] > 0).astype(jnp.int32), axis=0)   # [Bt, 1]
    seq_end = seq_len - 1

    mx = jnp.max(score, axis=-1, keepdims=True)
    best_last = jnp.min(jnp.where(score == mx, lane, Lp), axis=-1,
                        keepdims=True).astype(jnp.int32)               # [Bt, 1]
    pad = jnp.full((Bt, 1), label_pad_id, jnp.int32)

    def bwd(i, cur):
        t = S - 1 - i
        cur = jnp.where(t == seq_end, best_last, cur)
        pred_ref[t] = jnp.where(t <= seq_end, cur, pad)
        oh = (lane == cur).astype(jnp.int32)
        prev = jnp.sum(oh * hist_ref[t], axis=-1, keepdims=True)
        return jnp.where(t <= seq_end, prev, cur)

    lax.fori_loop(0, S, bwd, jnp.zeros((Bt, 1), jnp.int32), unroll=2)


def crf_decode(emis_sbl, mask, start_p, end_p, trans_p,
               label_pad_token_id=NER_PAD_ID):
    S, B, Lp = emis_sbl.shape
    tb = _batch_tile(B)
    nb = B // tb
    mask_sb1 = jnp.transpose(mask, (1, 0))[:, :, None].astype(jnp.int32)
    # per-tile backpointer history; on v7x this could be int8 (true L <= 127) to cut
    # VMEM 4x -- kept int32 here for lowering robustness.
    block_bytes = (S * tb * (Lp + 1) * 4 + 2 * Lp * 4 + Lp * Lp * 4
                   + S * tb * Lp * 4)
    kernel = functools.partial(_viterbi_kernel,
                               label_pad_id=int(label_pad_token_id))
    pred = pl.pallas_call(
        kernel,
        out_shape=jax.ShapeDtypeStruct((S, B, 1), jnp.int32),
        grid=(nb,),
        in_specs=[
            pl.BlockSpec((S, tb, Lp), lambda i: (0, i, 0)),
            pl.BlockSpec((S, tb, 1), lambda i: (0, i, 0)),
            pl.BlockSpec((1, Lp), lambda i: (0, 0)),
            pl.BlockSpec((1, Lp), lambda i: (0, 0)),
            pl.BlockSpec((Lp, Lp), lambda i: (0, 0)),
        ],
        out_specs=pl.BlockSpec((S, tb, 1), lambda i: (0, i, 0)),
        scratch_shapes=[pltpu.VMEM((S, tb, Lp), jnp.int32)],
        compiler_params=pltpu.CompilerParams(
            dimension_semantics=("parallel",),
            vmem_limit_bytes=_vmem_limit(block_bytes),
        ),
    )(emis_sbl, mask_sb1, start_p, end_p, jnp.transpose(trans_p))
    return jnp.transpose(pred[:, :, 0], (1, 0))            # [B, S] int32


# --------------------------------------------------------------------------
# CRF parameter padding + full forward, mirroring CRFClassifier.forward
# --------------------------------------------------------------------------
def _pad_crf_params(start, end, trans, Lp):
    L = start.shape[0]
    start_p = jnp.full((1, Lp), NEG, jnp.float32).at[0, :L].set(start.astype(jnp.float32))
    end_p = jnp.full((1, Lp), NEG, jnp.float32).at[0, :L].set(end.astype(jnp.float32))
    trans_p = jnp.full((Lp, Lp), NEG, jnp.float32).at[:L, :L].set(trans.astype(jnp.float32))
    return start_p, end_p, trans_p


def crf_classifier_forward(hidden_states, attention_mask, params, labels=None,
                           no_decode=False, label_pad_token_id=NER_PAD_ID):
    # Dropout is identity at inference time.
    L = params["weight"].shape[0]
    Lp = _round_up(max(L, 1), 128)
    emis_sbl = linear_emissions_seqmajor(hidden_states, params["weight"],
                                         params["bias"], Lp)        # [S, B, Lp]
    start_p, end_p, trans_p = _pad_crf_params(params["start"], params["end"],
                                              params["trans"], Lp)
    loss, pred_labels = None, None
    if labels is None:
        pred_labels = crf_decode(emis_sbl, attention_mask, start_p, end_p,
                                 trans_p, label_pad_token_id)
    else:
        loss = crf_loss(emis_sbl, labels, attention_mask, start_p, end_p, trans_p)
        if no_decode:
            pred_labels = crf_decode(emis_sbl, attention_mask, start_p, end_p,
                                     trans_p, label_pad_token_id)
    return loss, pred_labels


# --------------------------------------------------------------------------
# Pure-numpy references (torchcrf semantics) for validation
# --------------------------------------------------------------------------
def _ref_crf_loss(emis, tags, mask, start, end, trans):
    B, S, L = emis.shape
    total = 0.0
    for b in range(B):
        length = int(mask[b].sum())
        num = start[tags[b, 0]] + emis[b, 0, tags[b, 0]]
        alpha = start + emis[b, 0]
        for t in range(1, length):
            num += trans[tags[b, t - 1], tags[b, t]] + emis[b, t, tags[b, t]]
            s = alpha[:, None] + trans + emis[b, t][None, :]
            m = s.max(axis=0)
            alpha = m + np.log(np.exp(s - m[None, :]).sum(axis=0))
        num += end[tags[b, length - 1]]
        fin = alpha + end
        m = fin.max()
        denom = m + np.log(np.exp(fin - m).sum())
        total += num - denom
    return -total


def _ref_crf_decode(emis, mask, start, end, trans, pad_id):
    B, S, L = emis.shape
    preds = np.full((B, S), pad_id, np.int32)
    for b in range(B):
        length = int(mask[b].sum())
        score = start + emis[b, 0]
        hist = []
        for t in range(1, length):
            s = score[:, None] + trans + emis[b, t][None, :]
            hist.append(np.argmax(s, axis=0))
            score = np.max(s, axis=0)
        score = score + end
        best = int(np.argmax(score))
        tags = [best]
        for h in reversed(hist):
            best = int(h[best])
            tags.append(best)
        tags.reverse()
        preds[b, :length] = np.array(tags, np.int32)
    return preds


# --------------------------------------------------------------------------
if __name__ == "__main__":
    B, S, H, L = 2, 8, 32, 8   # batch, seq, hidden_size, num_labels

    key = jax.random.PRNGKey(0)
    k1, k2, k3, k4, k5, k6, k7 = jax.random.split(key, 7)
    hidden_states = jax.random.normal(k1, (B, S, H), jnp.float32)
    params = {
        "weight": jax.random.normal(k2, (L, H), jnp.float32) * 0.1,  # nn.Linear
        "bias":   jax.random.normal(k3, (L,), jnp.float32) * 0.1,
        "start":  jax.random.uniform(k4, (L,), jnp.float32, -0.1, 0.1),  # CRF
        "end":    jax.random.uniform(k5, (L,), jnp.float32, -0.1, 0.1),
        "trans":  jax.random.uniform(k6, (L, L), jnp.float32, -0.1, 0.1),
    }
    labels = jax.random.randint(k7, (B, S), 0, L, jnp.int32)
    lengths = jnp.array([S, 5], jnp.int32)
    attention_mask = (jnp.arange(S)[None, :] < lengths[:, None]).astype(jnp.int32)

    # Path 1: training-style forward (labels given) -> loss
    loss, _ = crf_classifier_forward(hidden_states, attention_mask, params,
                                     labels=labels)
    # Path 2: inference forward (labels=None) -> decoded labels
    _, pred_labels = crf_classifier_forward(hidden_states, attention_mask, params,
                                            labels=None)
    loss, pred_labels = jax.block_until_ready((loss, pred_labels))

    # ---------------- validation against numpy reference ----------------
    Lp = _round_up(L, 128)
    emis_pad = linear_emissions_seqmajor(hidden_states, params["weight"],
                                         params["bias"], Lp)       # [S, B, Lp]
    emis_k = np.asarray(emis_pad)[:, :, :L].transpose(1, 0, 2)     # [B, S, L]
    emis_ref = (np.asarray(hidden_states).reshape(B * S, H)
                @ np.asarray(params["weight"]).T
                + np.asarray(params["bias"])).reshape(B, S, L)
    np.testing.assert_allclose(emis_k, emis_ref, rtol=1e-3, atol=1e-3)
    # padded label lanes must carry exactly zero emission score
    np.testing.assert_array_equal(np.asarray(emis_pad)[:, :, L:], 0.0)

    mask_np = np.asarray(attention_mask)
    tags_np = np.asarray(labels)
    ref_loss = _ref_crf_loss(emis_k, tags_np, mask_np,
                             np.asarray(params["start"]),
                             np.asarray(params["end"]),
                             np.asarray(params["trans"]))
    ref_pred = _ref_crf_decode(emis_k, mask_np,
                               np.asarray(params["start"]),
                               np.asarray(params["end"]),
                               np.asarray(params["trans"]), NER_PAD_ID)
    np.testing.assert_allclose(np.asarray(loss), ref_loss, rtol=1e-3, atol=1e-3)
    np.testing.assert_array_equal(np.asarray(pred_labels), ref_pred)

    print("KERNEL_OK")
</pallas_src>

<mosaic_0001>
module attributes {stable_mosaic.version = 11 : i64} {
  func.func @_emission_kernel(%arg0: i32, %arg1: memref<2x8x32xf32, #tpu.memory_space<vmem>>, %arg2: memref<32x128xf32, #tpu.memory_space<vmem>>, %arg3: memref<1x128xf32, #tpu.memory_space<vmem>>, %arg4: memref<8x2x128xf32, #tpu.memory_space<vmem>>) attributes {dimension_semantics = [#tpu.dimension_semantics<parallel>], iteration_bounds = array<i64: 1>, scalar_prefetch = 0 : i64, scratch_operands = 0 : i64, tpu.core_type = #tpu.core_type<tc>, window_params = [{transform_indices = @transform_0, window_bounds = array<i64: 2, 8, 32>}, {pipeline_mode = #tpu.pipeline_mode<synchronous>, transform_indices = @transform_1, window_bounds = array<i64: 32, 128>}, {pipeline_mode = #tpu.pipeline_mode<synchronous>, transform_indices = @transform_2, window_bounds = array<i64: 1, 128>}, {transform_indices = @transform_3, window_bounds = array<i64: 8, 2, 128>}]} {
    %c0 = arith.constant 0 : index
    %c0_0 = arith.constant 0 : index
    %0 = vector.load %arg2[%c0, %c0_0] : memref<32x128xf32, #tpu.memory_space<vmem>>, vector<32x128xf32>
    %c0_1 = arith.constant 0 : index
    %c0_2 = arith.constant 0 : index
    %1 = vector.load %arg3[%c0_1, %c0_2] : memref<1x128xf32, #tpu.memory_space<vmem>>, vector<1x128xf32>
    %c0_3 = arith.constant 0 : index
    %c0_4 = arith.constant 0 : index
    %c0_5 = arith.constant 0 : index
    %2 = vector.load %arg1[%c0_3, %c0_4, %c0_5] : memref<2x8x32xf32, #tpu.memory_space<vmem>>, vector<1x8x32xf32>
    %3 = vector.shape_cast %2 : vector<1x8x32xf32> to vector<8x32xf32>
    %cst = arith.constant dense<0.000000e+00> : vector<8x128xf32>
    %4 = tpu.matmul %3, %0, %cst {dimension_numbers = #tpu.dot_dimension_numbers<[1], [0], [0], [1], [0, 0, 1, 1], [], []>} : vector<8x32xf32>, vector<32x128xf32>, vector<8x128xf32> -> vector<8x128xf32>
    %5 = vector.broadcast %1 : vector<1x128xf32> to vector<8x128xf32>
    %6 = arith.addf %4, %5 : vector<8x128xf32>
    %7 = vector.shape_cast %6 : vector<8x128xf32> to vector<8x1x128xf32>
    %c0_6 = arith.constant 0 : index
    %c0_7 = arith.constant 0 : index
    %c0_8 = arith.constant 0 : index
    %8 = vector.load %arg4[%c0_6, %c0_7, %c0_8] : memref<8x2x128xf32, #tpu.memory_space<vmem>>, vector<8x1x128xf32>
    tpu.vector_store %arg4[%c0_6, %c0_7, %c0_8], %7 {strides = array<i32>} : memref<8x2x128xf32, #tpu.memory_space<vmem>>, vector<8x1x128xf32>,
    %c1 = arith.constant 1 : index
    %c0_9 = arith.constant 0 : index
    %c0_10 = arith.constant 0 : index
    %9 = vector.load %arg1[%c1, %c0_9, %c0_10] : memref<2x8x32xf32, #tpu.memory_space<vmem>>, vector<1x8x32xf32>
    %10 = vector.shape_cast %9 : vector<1x8x32xf32> to vector<8x32xf32>
    %cst_11 = arith.constant dense<0.000000e+00> : vector<8x128xf32>
    %11 = tpu.matmul %10, %0, %cst_11 {dimension_numbers = #tpu.dot_dimension_numbers<[1], [0], [0], [1], [0, 0, 1, 1], [], []>} : vector<8x32xf32>, vector<32x128xf32>, vector<8x128xf32> -> vector<8x128xf32>
    %12 = vector.broadcast %1 : vector<1x128xf32> to vector<8x128xf32>
    %13 = arith.addf %11, %12 : vector<8x128xf32>
    %14 = vector.shape_cast %13 : vector<8x128xf32> to vector<8x1x128xf32>
    %c0_12 = arith.constant 0 : index
    %c1_13 = arith.constant 1 : index
    %c0_14 = arith.constant 0 : index
    %15 = vector.load %arg4[%c0_12, %c1_13, %c0_14] : memref<8x2x128xf32, #tpu.memory_space<vmem>>, vector<8x1x128xf32>
    tpu.vector_store %arg4[%c0_12, %c1_13, %c0_14], %14 {strides = array<i32>} : memref<8x2x128xf32, #tpu.memory_space<vmem>>, vector<8x1x128xf32>,
    return
  }
  func.func @transform_0(%arg0: i32) -> (i32, i32, i32) {
    %c0_i32 = arith.constant 0 : i32
    %c0_i32_0 = arith.constant 0 : i32
    %c0_i32_1 = arith.constant 0 : i32
    return %c0_i32, %arg0, %c0_i32_0 : i32, i32, i32
  }
  func.func @transform_1(%arg0: i32) -> (i32, i32) {
    %c0_i32 = arith.constant 0 : i32
    %c0_i32_0 = arith.constant 0 : i32
    %c0_i32_1 = arith.constant 0 : i32
    return %c0_i32, %c0_i32_0 : i32, i32
  }
  func.func @transform_2(%arg0: i32) -> (i32, i32) {
    %c0_i32 = arith.constant 0 : i32
    %c0_i32_0 = arith.constant 0 : i32
    %c0_i32_1 = arith.constant 0 : i32
    return %c0_i32, %c0_i32_0 : i32, i32
  }
  func.func @transform_3(%arg0: i32) -> (i32, i32, i32) {
    %c0_i32 = arith.constant 0 : i32
    %c0_i32_0 = arith.constant 0 : i32
    %c0_i32_1 = arith.constant 0 : i32
    return %arg0, %c0_i32, %c0_i32_0 : i32, i32, i32
  }
}

</mosaic_0001>

<llo_original>
// kernel: tpu_custom_call.1
$region0: #{tpu_custom_call.1}
  #allocation0 [shape = 'u32[]', space=smem, size = 0x4, offset = 0x4, fixed_abs, tag = 'smem constant byte address 0x4 - core index']
  #allocation1 [shape = 'u32[144,128]{1,0:T(1,128)}', space=vmem, size = 0x12000, scoped, tag = 'internal scratch']
  %s0 = inlined_call_operand.hbm [shape: f32[2,8,32], index: 0, kind: input, shape index: {}]
  %s1 = inlined_call_operand.hbm [shape: f32[32,128], index: 1, kind: input, shape index: {}]
  %s2 = inlined_call_operand.vmem [shape: f32[1,128], index: 2, kind: input, shape index: {}]
  %s3 = inlined_call_operand.hbm [shape: f32[8,2,128], index: 3, kind: output, shape index: {}]
  %s4 = sld [smem:[#allocation0]]
  $region30: #{tpu_custom_call.1} parent=0
    _
  %s6 = ssub.s32 1, %s4
  %s7 = scalar_select 0, %s6, %s4
  $region1: #{tpu_custom_call.1} parent=0
    #allocation2 [shape = 'u8[8192]{0}', space=vmem, size = 0x2000, scoped, tag = 'input window, operand 0, single buffered']
    #allocation3 [shape = 's32[1]{0}', space=sflag, size = 0x4, scoped, tag = 'scoped memory for tpu_custom_call.1']
    #allocation4 [shape = 's32[1]{0}', space=sflag, size = 0x4, scoped, tag = 'scoped memory for tpu_custom_call.1']
    #allocation5 [shape = 'u8[16384]{0}', space=vmem, size = 0x4000, scoped, tag = 'input window, operand 1, single buffered']
    #allocation6 [shape = 's32[1]{0}', space=sflag, size = 0x4, scoped, tag = 'scoped memory for tpu_custom_call.1']
    #allocation7 [shape = 'u8[8192]{0}', space=vmem, size = 0x2000, scoped, tag = 'output window, operand 0, single buffered']
    %8 = vsyncpa [#allocation3], 0
    %9 = vsyncpa [#allocation6], 0
    %10 = vsyncpa [#allocation4], 0
    // Predicated region
    $region2: #{tpu_custom_call.1} parent=1 // pred_check
      _
    $region3: #{tpu_custom_call.1} parent=1 // pred_check_branch
      %12 = sbr.rel (0) target = $region5
    $region4: #{tpu_custom_call.1} parent=1 // pred_region
      %s14 = ssub.s32 256, 256
      %15 = vsyncadd [#allocation3], %s14
      %s16 = sshll.u32 [#allocation2], 4
      %s17 = int_to_ptr.vmem [resolvable:$true] %s16
      %22 = dma.hbm_to_vmem [thread:$0]  %s0, 256, %s17, [#allocation3], 128, 128, 8
    $region5: #{tpu_custom_call.1} parent=1 // pred_fallthru
      _
    // Predicated region
    $region6: #{tpu_custom_call.1} parent=1 // pred_check
      _
    $region7: #{tpu_custom_call.1} parent=1 // pred_check_branch
      %24 = sbr.rel (0) target = $region9
    $region8: #{tpu_custom_call.1} parent=1 // pred_region
      %s26 = ssub.s32 512, 512
      %27 = vsyncadd [#allocation6], %s26
      %s28 = sshll.u32 [#allocation5], 4
      %s29 = int_to_ptr.vmem [resolvable:$true] %s28
      %34 = dma.hbm_to_vmem [thread:$0]  %s1, 512, %s29, [#allocation6], 128, 128, 8
    $region9: #{tpu_custom_call.1} parent=1 // pred_fallthru
      _
    // Predicated region
    $region10: #{tpu_custom_call.1} parent=1 // pred_check
      _
    $region11: #{tpu_custom_call.1} parent=1 // pred_check_branch
      %36 = sbr.rel (0) target = $region13
    $region12: #{tpu_custom_call.1} parent=1 // pred_region
      _
    $region13: #{tpu_custom_call.1} parent=1 // pred_fallthru
      _
    // Predicated region
    $region14: #{tpu_custom_call.1} parent=1 // pred_check
      _
    $region15: #{tpu_custom_call.1} parent=1 // pred_check_branch
      %38 = sbr.rel (0) target = $region17
    $region16: #{tpu_custom_call.1} parent=1 // pred_region
      %39 = dma.done [#allocation3], 256
    $region17: #{tpu_custom_call.1} parent=1 // pred_fallthru
      _
    // Predicated region
    $region18: #{tpu_custom_call.1} parent=1 // pred_check
      _
    $region19: #{tpu_custom_call.1} parent=1 // pred_check_branch
      %41 = sbr.rel (0) target = $region21
    $region20: #{tpu_custom_call.1} parent=1 // pred_region
      %42 = dma.done [#allocation6], 512
    $region21: #{tpu_custom_call.1} parent=1 // pred_fallthru
      _
    %v43 = vld [vmem:[#allocation5] sm:$0xff]
    %v44 = vld [vmem:[#allocation5 + $0x8] sm:$0xff]
    %v45 = vld [vmem:[#allocation5 + $0x10] sm:$0xff]
    %v46 = vld [vmem:[#allocation5 + $0x18] sm:$0xff]
    %v47 = vld [vmem:[%s2] sm:$0x1]
    %v48 = vld [vmem:[#allocation2] sm:$0xff]
    %v50 = vlaneseq
    %v51 = vshrl.u32 %v50, 7
    %v52 = vsub.s32 0, %v51
    %v53 = vrot.slane %v47, %v52
    %vm55 = vcmask 261120
    %v57 = vsel %vm55, %v48, 0
    %59 = vmatprep.subr.mxu0 0.0
    %60 = vmatpush1.msra.mxu0 0.0
    %61 = vmatprep.subr.mxu0 0.0
    %62 = vmatpush1.msra.mxu0 0.0
    %63 = vmatprep.subr.mxu0 0.0
    %64 = vmatpush1.msra.mxu0 0.0
    %65 = vmatprep.subr.mxu0 0.0
    %66 = vmatpush1.msra.mxu0 0.0
    %67 = vmatprep.subr.mxu0 0.0
    %68 = vmatpush1.msra.mxu0 0.0
    %69 = vmatprep.subr.mxu0 0.0
    %70 = vmatpush1.msra.mxu0 0.0
    %71 = vmatprep.subr.mxu0 0.0
    %72 = vmatpush1.msra.mxu0 0.0
    %73 = vmatprep.subr.mxu0 0.0
    %74 = vmatpush1.msra.mxu0 0.0
    %75 = vmatprep.subr.mxu0 0.0
    %76 = vmatpush1.msra.mxu0 0.0
    %77 = vmatprep.subr.mxu0 0.0
    %78 = vmatpush1.msra.mxu0 0.0
    %79 = vmatprep.subr.mxu0 0.0
    %80 = vmatpush1.msra.mxu0 0.0
    %81 = vmatprep.subr.mxu0 0.0
    %82 = vmatpush1.msra.mxu0 0.0
    %83 = vmatprep.subr.mxu0 0.0
    %84 = vmatpush1.msra.mxu0 %v46
    %85 = vmatprep.subr.mxu0 0.0
    %86 = vmatpush1.msra.mxu0 %v45
    %87 = vmatprep.subr.mxu0 0.0
    %88 = vmatpush1.msra.mxu0 %v44
    %89 = vmatprep.subr.mxu0 0.0
    %90 = vmatpush1.msra.mxu0 %v43
    %91 = vmatprep.subr.mxu0 0.0
    %92 = vmatpush2.msra.mxu0 0.0
    %93 = vmatprep.subr.mxu0 0.0
    %94 = vmatpush2.msra.mxu0 0.0
    %95 = vmatprep.subr.mxu0 0.0
    %96 = vmatpush2.msra.mxu0 0.0
    %97 = vmatprep.subr.mxu0 0.0
    %98 = vmatpush2.msra.mxu0 0.0
    %99 = vmatprep.subr.mxu0 0.0
    %100 = vmatpush2.msra.mxu0 0.0
    %101 = vmatprep.subr.mxu0 0.0
    %102 = vmatpush2.msra.mxu0 0.0
    %103 = vmatprep.subr.mxu0 0.0
    %104 = vmatpush2.msra.mxu0 0.0
    %105 = vmatprep.subr.mxu0 0.0
    %106 = vmatpush2.msra.mxu0 0.0
    %107 = vmatprep.subr.mxu0 0.0
    %108 = vmatpush2.msra.mxu0 0.0
    %109 = vmatprep.subr.mxu0 0.0
    %110 = vmatpush2.msra.mxu0 0.0
    %111 = vmatprep.subr.mxu0 0.0
    %112 = vmatpush2.msra.mxu0 0.0
    %113 = vmatprep.subr.mxu0 0.0
    %114 = vmatpush2.msra.mxu0 0.0
    %115 = vmatprep.subr.mxu0 0.0
    %116 = vmatpush2.msra.mxu0 0.0
    %117 = vmatprep.subr.mxu0 0.0
    %118 = vmatpush2.msra.mxu0 0.0
    %119 = vmatprep.subr.mxu0 0.0
    %120 = vmatpush2.msra.mxu0 0.0
    %121 = vmatprep.subr.mxu0 0.0
    %122 = vmatpush2.msra.mxu0 0.0
    %123 = vmatprep.mubr.f32.mxu0 0.0
    %124 = vmatmul.mubr.f32.gmra.mxu0 %v57
    %v125 = vpop.f32.mrf.mxu0
    %v126 = vadd.f32 %v53, %v125
    %v127 = vpop.f32.mrf.mxu0
    %128 = vdwg.mxu0
    %v130 = vcombine.high %v126, %v126
    %v132 = vunpack.c.l.s4 1966171168
    %v133 = vunpack.c.0.s8 %v132
    %v134 = vlaneseq
    %v135 = vshrl.u32 %v134, 7
    %v136 = vsub.s32 %v133, %v135
    %v137 = vrot.slane %v126, %v136
    %v139 = vunpack.c.l.s4 1966171168
    %v140 = vunpack.c.0.s8 %v139
    %v141 = vlaneseq
    %v142 = vshrl.u32 %v141, 7
    %v143 = vsub.s32 %v140, %v142
    %v144 = vrot.slane %v130, %v143
    %v145 = vcombine.high %v137, %v137
    %v146 = vcombine.high %v144, %v144
    %v148 = vunpack.c.l.s4 1966171168
    %v149 = vunpack.c.0.s8 %v148
    %v150 = vlaneseq
    %v151 = vshrl.u32 %v150, 7
    %v152 = vsub.s32 %v149, %v151
    %v153 = vrot.slane %v137, %v152
    %v155 = vunpack.c.l.s4 1966171168
    %v156 = vunpack.c.0.s8 %v155
    %v157 = vlaneseq
    %v158 = vshrl.u32 %v157, 7
    %v159 = vsub.s32 %v156, %v158
    %v160 = vrot.slane %v144, %v159
    %v162 = vunpack.c.l.s4 1966171168
    %v163 = vunpack.c.0.s8 %v162
    %v164 = vlaneseq
    %v165 = vshrl.u32 %v164, 7
    %v166 = vsub.s32 %v163, %v165
    %v167 = vrot.slane %v145, %v166
    %v169 = vunpack.c.l.s4 1966171168
    %v170 = vunpack.c.0.s8 %v169
    %v171 = vlaneseq
    %v172 = vshrl.u32 %v171, 7
    %v173 = vsub.s32 %v170, %v172
    %v174 = vrot.slane %v146, %v173
    %v175 = vcombine.high %v153, %v153
    %v176 = vcombine.high %v160, %v160
    %v177 = vcombine.high %v167, %v167
    %v178 = vcombine.high %v174, %v174
    %187 = vst [vmem:[#allocation7] sm:$0x1] %v153
    %188 = vst [vmem:[#allocation7 + $0x2] sm:$0x1] %v167
    %189 = vst [vmem:[#allocation7 + $0x4] sm:$0x1] %v175
    %190 = vst [vmem:[#allocation7 + $0x6] sm:$0x1] %v177
    %191 = vst [vmem:[#allocation7 + $0x8] sm:$0x1] %v160
    %192 = vst [vmem:[#allocation7 + $0xa] sm:$0x1] %v174
    %193 = vst [vmem:[#allocation7 + $0xc] sm:$0x1] %v176
    %194 = vst [vmem:[#allocation7 + $0xe] sm:$0x1] %v178
    %s195 = scalar_lea.vmem [#allocation2], 8
    %v196 = vld [vmem:[%s195] sm:$0xff]
    %v198 = vsel %vm55, %v196, 0
    %200 = vmatprep.subr.mxu0 0.0
    %201 = vmatpush1.msra.mxu0 0.0
    %202 = vmatprep.subr.mxu0 0.0
    %203 = vmatpush1.msra.mxu0 0.0
    %204 = vmatprep.subr.mxu0 0.0
    %205 = vmatpush1.msra.mxu0 0.0
    %206 = vmatprep.subr.mxu0 0.0
    %207 = vmatpush1.msra.mxu0 0.0
    %208 = vmatprep.subr.mxu0 0.0
    %209 = vmatpush1.msra.mxu0 0.0
    %210 = vmatprep.subr.mxu0 0.0
    %211 = vmatpush1.msra.mxu0 0.0
    %212 = vmatprep.subr.mxu0 0.0
    %213 = vmatpush1.msra.mxu0 0.0
    %214 = vmatprep.subr.mxu0 0.0
    %215 = vmatpush1.msra.mxu0 0.0
    %216 = vmatprep.subr.mxu0 0.0
    %217 = vmatpush1.msra.mxu0 0.0
    %218 = vmatprep.subr.mxu0 0.0
    %219 = vmatpush1.msra.mxu0 0.0
    %220 = vmatprep.subr.mxu0 0.0
    %221 = vmatpush1.msra.mxu0 0.0
    %222 = vmatprep.subr.mxu0 0.0
    %223 = vmatpush1.msra.mxu0 0.0
    %224 = vmatprep.subr.mxu0 0.0
    %225 = vmatpush1.msra.mxu0 %v46
    %226 = vmatprep.subr.mxu0 0.0
    %227 = vmatpush1.msra.mxu0 %v45
    %228 = vmatprep.subr.mxu0 0.0
    %229 = vmatpush1.msra.mxu0 %v44
    %230 = vmatprep.subr.mxu0 0.0
    %231 = vmatpush1.msra.mxu0 %v43
    %232 = vmatprep.subr.mxu0 0.0
    %233 = vmatpush2.msra.mxu0 0.0
    %234 = vmatprep.subr.mxu0 0.0
    %235 = vmatpush2.msra.mxu0 0.0
    %236 = vmatprep.subr.mxu0 0.0
    %237 = vmatpush2.msra.mxu0 0.0
    %238 = vmatprep.subr.mxu0 0.0
    %239 = vmatpush2.msra.mxu0 0.0
    %240 = vmatprep.subr.mxu0 0.0
    %241 = vmatpush2.msra.mxu0 0.0
    %242 = vmatprep.subr.mxu0 0.0
    %243 = vmatpush2.msra.mxu0 0.0
    %244 = vmatprep.subr.mxu0 0.0
    %245 = vmatpush2.msra.mxu0 0.0
    %246 = vmatprep.subr.mxu0 0.0
    %247 = vmatpush2.msra.mxu0 0.0
    %248 = vmatprep.subr.mxu0 0.0
    %249 = vmatpush2.msra.mxu0 0.0
    %250 = vmatprep.subr.mxu0 0.0
    %251 = vmatpush2.msra.mxu0 0.0
    %252 = vmatprep.subr.mxu0 0.0
    %253 = vmatpush2.msra.mxu0 0.0
    %254 = vmatprep.subr.mxu0 0.0
    %255 = vmatpush2.msra.mxu0 0.0
    %256 = vmatprep.subr.mxu0 0.0
    %257 = vmatpush2.msra.mxu0 0.0
    %258 = vmatprep.subr.mxu0 0.0
    %259 = vmatpush2.msra.mxu0 0.0
    %260 = vmatprep.subr.mxu0 0.0
    %261 = vmatpush2.msra.mxu0 0.0
    %262 = vmatprep.subr.mxu0 0.0
    %263 = vmatpush2.msra.mxu0 0.0
    %264 = vmatprep.mubr.f32.mxu0 0.0
    %265 = vmatmul.mubr.f32.gmra.mxu0 %v198
    %v266 = vpop.f32.mrf.mxu0
    %v267 = vadd.f32 %v53, %v266
    %v268 = vpop.f32.mrf.mxu0
    %269 = vdwg.mxu0
    %v271 = vcombine.high %v267, %v267
    %v273 = vunpack.c.l.s4 1966171168
    %v274 = vunpack.c.0.s8 %v273
    %v275 = vlaneseq
    %v276 = vshrl.u32 %v275, 7
    %v277 = vsub.s32 %v274, %v276
    %v278 = vrot.slane %v267, %v277
    %v280 = vunpack.c.l.s4 1966171168
    %v281 = vunpack.c.0.s8 %v280
    %v282 = vlaneseq
    %v283 = vshrl.u32 %v282, 7
    %v284 = vsub.s32 %v281, %v283
    %v285 = vrot.slane %v271, %v284
    %v286 = vcombine.high %v278, %v278
    %v287 = vcombine.high %v285, %v285
    %v289 = vunpack.c.l.s4 1966171168
    %v290 = vunpack.c.0.s8 %v289
    %v291 = vlaneseq
    %v292 = vshrl.u32 %v291, 7
    %v293 = vsub.s32 %v290, %v292
    %v294 = vrot.slane %v278, %v293
    %v296 = vunpack.c.l.s4 1966171168
    %v297 = vunpack.c.0.s8 %v296
    %v298 = vlaneseq
    %v299 = vshrl.u32 %v298, 7
    %v300 = vsub.s32 %v297, %v299
    %v301 = vrot.slane %v285, %v300
    %v303 = vunpack.c.l.s4 1966171168
    %v304 = vunpack.c.0.s8 %v303
    %v305 = vlaneseq
    %v306 = vshrl.u32 %v305, 7
    %v307 = vsub.s32 %v304, %v306
    %v308 = vrot.slane %v286, %v307
    %v310 = vunpack.c.l.s4 1966171168
    %v311 = vunpack.c.0.s8 %v310
    %v312 = vlaneseq
    %v313 = vshrl.u32 %v312, 7
    %v314 = vsub.s32 %v311, %v313
    %v315 = vrot.slane %v287, %v314
    %v316 = vcombine.high %v294, %v294
    %v317 = vcombine.high %v301, %v301
    %v318 = vcombine.high %v308, %v308
    %v319 = vcombine.high %v315, %v315
    %328 = vst [vmem:[#allocation7 + $0x1] sm:$0x1] %v294
    %329 = vst [vmem:[#allocation7 + $0x3] sm:$0x1] %v308
    %330 = vst [vmem:[#allocation7 + $0x5] sm:$0x1] %v316
    %331 = vst [vmem:[#allocation7 + $0x7] sm:$0x1] %v318
    %332 = vst [vmem:[#allocation7 + $0x9] sm:$0x1] %v301
    %333 = vst [vmem:[#allocation7 + $0xb] sm:$0x1] %v315
    %334 = vst [vmem:[#allocation7 + $0xd] sm:$0x1] %v317
    %335 = vst [vmem:[#allocation7 + $0xf] sm:$0x1] %v319
    // Predicated region
    $region22: #{tpu_custom_call.1} parent=1 // pred_check
      _
    $region23: #{tpu_custom_call.1} parent=1 // pred_check_branch
      %337 = sbr.rel (0) target = $region25
    $region24: #{tpu_custom_call.1} parent=1 // pred_region
      %s339 = ssub.s32 256, 256
      %340 = vsyncadd [#allocation4], %s339
      %s341 = sshll.u32 [#allocation7], 4
      %s342 = int_to_ptr.vmem [resolvable:$true] %s341
      %347 = dma.vmem_to_hbm [thread:$0]  %s342, 256, %s3, [#allocation4], 32, 32, 2
    $region25: #{tpu_custom_call.1} parent=1 // pred_fallthru
      _
    // Predicated region
    $region26: #{tpu_custom_call.1} parent=1 // pred_check
      _
    $region27: #{tpu_custom_call.1} parent=1 // pred_check_branch
      %349 = sbr.rel (0) target = $region29
    $region28: #{tpu_custom_call.1} parent=1 // pred_region
      %350 = dma.done [#allocation4], 256
    $region29: #{tpu_custom_call.1} parent=1 // pred_fallthru
      _
    %351 = vsyncpa [#allocation3], 1
    %352 = vsyncpa [#allocation6], 1
    %353 = vsyncpa [#allocation4], 1

</llo_original>
